<compile_context>
chip_gen: v7x
topology: tpu7x:2x2x1
jax: 0.10.0
libtpu: 0.0.40
codegen_flags: <defaults>
</compile_context>

<pallas_src>
import math

import jax
import jax.numpy as jnp
from jax import lax
from jax.experimental import pallas as pl
from jax.experimental.pallas import tpu as pltpu

EPSILON_FP16 = 1e-4            # constant used by the original repo
_LANES = 128
_SUBLANES = 8
_TILE_BYTES = 8 * 1024 * 1024      # per double-buffered input tile, in input-dtype bytes
_VMEM_LIMIT = 48 * 1024 * 1024     # stays under v7x's 64 MiB physical VMEM
_MAX_SUPER_WIDTH = 16384           # beyond this, P is large and the simple path is lane-dense
_SPLIT_MIN_TILES = 4               # 2-way TensorCore split only when there is enough work
_F32_WIDEN_CAP = 32                # output lanes for the HIGHEST-precision f32 dot (v5e-safe)


def _cdiv(a, b):
    return -(-a // b)


def _round_down_mult(x, m):
    return x // m * m


def _largest_divisor_leq(n, cap):
    for f in range(min(n, cap), 0, -1):
        if n % f == 0:
            return f
    return 1


def _make_packed_kernel(*, tile_rows, n_super, tiles_per_split, n_splits,
                        sin_scale, cast_to_f32, precision):
    """Lane-dense path: each W-wide super-row packs W // n_patches original rows."""
    needs_mask = n_splits * tiles_per_split * tile_rows != n_super

    def kernel(x_ref, s_ref, out_ref, acc_ref):
        c = pl.program_id(0)
        i = pl.program_id(1)

        @pl.when(i == 0)
        def _init():
            acc_ref[...] = jnp.zeros_like(acc_ref)

        m = x_ref[...]
        if cast_to_f32:
            m = m.astype(jnp.float32)
        # Exact 0/1 segment matmul on the (otherwise idle) MXU: sums[t, g] is the
        # patch-sum of original row g inside super-row t.  The segment matrix is a
        # resident input, so nothing is rebuilt per grid step.
        sums = jnp.dot(m, s_ref[...], preferred_element_type=jnp.float32,
                       precision=precision)                                  # (T, G)
        loss = 1.0 / (jnp.sin(sums * jnp.float32(sin_scale))
                      + jnp.float32(EPSILON_FP16)) - 1.0
        if needs_mask:
            t = c * tiles_per_split + i
            row = t * tile_rows + lax.broadcasted_iota(jnp.int32, (tile_rows, 1), 0)
            loss = jnp.where(row < n_super, loss, 0.0)
        acc_ref[...] += loss            # lane-dense VPU accumulate; no per-step reduce

        @pl.when(i == tiles_per_split - 1)
        def _finalize():
            partial = jnp.sum(acc_ref[...])
            sub = lax.broadcasted_iota(jnp.int32, (1, _SUBLANES, _LANES), 1)
            lane = lax.broadcasted_iota(jnp.int32, (1, _SUBLANES, _LANES), 2)
            out_ref[...] = jnp.where((sub == 0) & (lane == 0), partial, 0.0)

    return kernel


def _make_simple_kernel(*, tile_rows, n_rows, tiles_per_split, n_splits, sin_scale):
    """Fallback: (T, P) blocks + VPU row-sum (when lane packing is unavailable)."""
    needs_mask = n_splits * tiles_per_split * tile_rows != n_rows

    def kernel(x_ref, out_ref, acc_ref):
        c = pl.program_id(0)
        i = pl.program_id(1)

        @pl.when(i == 0)
        def _init():
            acc_ref[...] = jnp.zeros_like(acc_ref)

        m = x_ref[...].astype(jnp.float32)                                   # (T, P)
        sums = jnp.sum(m, axis=1, keepdims=True)                             # (T, 1)
        loss = 1.0 / (jnp.sin(sums * jnp.float32(sin_scale))
                      + jnp.float32(EPSILON_FP16)) - 1.0
        if needs_mask:
            t = c * tiles_per_split + i
            row = t * tile_rows + lax.broadcasted_iota(jnp.int32, (tile_rows, 1), 0)
            loss = jnp.where(row < n_rows, loss, 0.0)
        acc_ref[...] += loss

        @pl.when(i == tiles_per_split - 1)
        def _finalize():
            partial = jnp.sum(acc_ref[...])
            sub = lax.broadcasted_iota(jnp.int32, (1, _SUBLANES, _LANES), 1)
            lane = lax.broadcasted_iota(jnp.int32, (1, _SUBLANES, _LANES), 2)
            out_ref[...] = jnp.where((sub == 0) & (lane == 0), partial, 0.0)

    return kernel


def sparsity_loss(masks: jax.Array, n_masks: int, beta: float = 1.5,
                  tile_bytes: int = _TILE_BYTES) -> jax.Array:
    """masks: (n_masks, batch, n_patches, 1); returns scalar float32 loss."""
    nm, batch, n_patches, one = masks.shape
    assert nm == n_masks and one == 1
    if masks.dtype not in (jnp.float32, jnp.bfloat16, jnp.float16):
        masks = masks.astype(jnp.float32)

    n_rows = nm * batch
    total = n_rows * n_patches
    final_scale = math.sin(math.pi * n_masks ** (-beta)) / batch
    sin_scale = math.pi / n_patches
    itemsize = masks.dtype.itemsize

    g0 = math.gcd(n_patches, _LANES)
    w0 = n_patches * _LANES // g0                        # lcm(n_patches, 128)
    use_packed = (total % w0 == 0) and (w0 <= _MAX_SUPER_WIDTH)

    if use_packed:
        g_base = w0 // n_patches
        direct_mxu = masks.dtype == jnp.bfloat16         # 0/1 matmul exact in bf16
        g_cap = _LANES if direct_mxu else _F32_WIDEN_CAP
        n_super0 = total // w0
        widen = _largest_divisor_leq(n_super0, max(1, g_cap // g_base))
        width = widen * w0
        g_out = widen * g_base
        n_super = n_super0 // widen
        x = masks.reshape(n_super, width)                # contiguous reshape: free

        # Resident 0/1 segment matrix, built once in the wrapper (hoisted out of the
        # sequential grid loop) and kept in VMEM via a constant index_map.
        lane = lax.broadcasted_iota(jnp.int32, (width, g_out), 0)
        seg = lax.broadcasted_iota(jnp.int32, (width, g_out), 1)
        s_dtype = masks.dtype if direct_mxu else jnp.float32
        s_mat = (lane // n_patches == seg).astype(s_dtype)
        s_itemsize = 2 if direct_mxu else 4

        max_tile = max(_SUBLANES,
                       _round_down_mult(tile_bytes // (width * itemsize), _SUBLANES))
        if n_super <= max_tile:
            tile_rows, num_tiles = n_super, 1
        else:
            tile_rows, num_tiles = max_tile, _cdiv(n_super, max_tile)
        n_splits = 2 if num_tiles >= _SPLIT_MIN_TILES else 1
        tiles_per_split = _cdiv(num_tiles, n_splits)

        kernel = _make_packed_kernel(
            tile_rows=tile_rows, n_super=n_super,
            tiles_per_split=tiles_per_split, n_splits=n_splits,
            sin_scale=sin_scale, cast_to_f32=not direct_mxu,
            precision=None if direct_mxu else lax.Precision.HIGHEST)

        if n_splits * tiles_per_split == num_tiles:
            x_map = lambda c, i, t=tiles_per_split: (c * t + i, 0)
        else:  # clamp the duplicate overhang tile; its rows are masked in-kernel
            x_map = lambda c, i, t=tiles_per_split, last=num_tiles - 1: (
                jnp.minimum(c * t + i, last), 0)
        in_specs = [pl.BlockSpec((tile_rows, width), x_map),
                    pl.BlockSpec((width, g_out), lambda c, i: (0, 0))]
        operands = (x, s_mat)
        acc_shape = (tile_rows, g_out)
        bytes_accessed = total * itemsize + width * g_out * s_itemsize
    else:
        x = masks.reshape(n_rows, n_patches)             # contiguous reshape: free
        padded_p = _cdiv(n_patches, _LANES) * _LANES
        max_tile = max(_SUBLANES,
                       _round_down_mult(tile_bytes // (padded_p * itemsize), _SUBLANES))
        if n_rows <= max_tile:
            tile_rows, num_tiles = n_rows, 1
        else:
            tile_rows, num_tiles = max_tile, _cdiv(n_rows, max_tile)
        n_splits = 2 if num_tiles >= _SPLIT_MIN_TILES else 1
        tiles_per_split = _cdiv(num_tiles, n_splits)

        kernel = _make_simple_kernel(
            tile_rows=tile_rows, n_rows=n_rows,
            tiles_per_split=tiles_per_split, n_splits=n_splits, sin_scale=sin_scale)

        if n_splits * tiles_per_split == num_tiles:
            x_map = lambda c, i, t=tiles_per_split: (c * t + i, 0)
        else:
            x_map = lambda c, i, t=tiles_per_split, last=num_tiles - 1: (
                jnp.minimum(c * t + i, last), 0)
        in_specs = [pl.BlockSpec((tile_rows, n_patches), x_map)]
        operands = (x,)
        acc_shape = (tile_rows, 1)
        bytes_accessed = total * itemsize

    cost = pl.CostEstimate(
        flops=int(2 * total + 8 * n_rows),
        transcendentals=int(2 * n_rows),
        bytes_accessed=int(bytes_accessed + n_splits * _SUBLANES * _LANES * 4),
    )

    out = pl.pallas_call(
        kernel,
        grid=(n_splits, tiles_per_split),
        in_specs=in_specs,
        out_specs=pl.BlockSpec((1, _SUBLANES, _LANES), lambda c, i: (c, 0, 0)),
        out_shape=jax.ShapeDtypeStruct((n_splits, _SUBLANES, _LANES), jnp.float32),
        scratch_shapes=[pltpu.VMEM(acc_shape, jnp.float32)],
        compiler_params=pltpu.CompilerParams(
            dimension_semantics=("parallel", "arbitrary"),
            vmem_limit_bytes=_VMEM_LIMIT),
        cost_estimate=cost,
    )(*operands)

    # Global scale sin(pi*n_masks**-beta) and the mean over batch are applied here so
    # every TensorCore partial gets scaled identically.
    return jnp.sum(out) * jnp.float32(final_scale)


def _reference(masks, n_masks, beta=1.5):
    # pure-JAX reference mirroring the PyTorch forward
    m = jnp.transpose(masks[..., 0], (1, 0, 2)).astype(jnp.float32)   # (b, n, p)
    probs = m.sum(2) / m.shape[2]
    loss = 1.0 / (jnp.sin(probs * math.pi) + EPSILON_FP16) - 1.0
    loss = loss * math.sin(math.pi * n_masks ** (-beta))
    return loss.sum(axis=1).mean()


if __name__ == "__main__":
    key = jax.random.PRNGKey(0)

    def run_case(n_masks, batch, n_patches, beta=1.5, dtype=jnp.float32,
                 tile_bytes=_TILE_BYTES):
        k = jax.random.fold_in(key, n_masks * 10000 + batch * 100 + n_patches)
        masks = jax.random.uniform(
            k, (n_masks, batch, n_patches, 1), dtype=jnp.float32,
            minval=0.05, maxval=0.95).astype(dtype)
        got = jax.block_until_ready(
            sparsity_loss(masks, n_masks=n_masks, beta=beta, tile_bytes=tile_bytes))
        want = _reference(masks, n_masks, beta=beta)
        assert jnp.allclose(got, want, rtol=1e-4, atol=1e-5), (
            n_masks, batch, n_patches, str(dtype), got, want)

    # 1) primary small shape from the module spec: packed path, single tile
    run_case(n_masks=4, batch=2, n_patches=16)
    # 2) packed path, many tiles + 2-way core split + clamped/masked overhang tile
    run_case(n_masks=8, batch=144, n_patches=16, tile_bytes=4096)
    # 3) bf16 packed path: tile feeds the MXU directly, widened lane-dense loss
    run_case(n_masks=4, batch=16, n_patches=32, dtype=jnp.bfloat16)
    # 4) fallback path (total elements not divisible by lcm(P,128)), single tile
    run_case(n_masks=4, batch=2, n_patches=20)
    # 5) fallback path, many tiles + 2-way split + overhang masking
    run_case(n_masks=7, batch=5, n_patches=20, tile_bytes=4096)

    print("KERNEL_OK")
</pallas_src>

<mosaic_0001>
module attributes {stable_mosaic.version = 11 : i64} {
  func.func @kernel(%arg0: i32, %arg1: i32, %arg2: memref<1x128xf32, #tpu.memory_space<vmem>>, %arg3: memref<128x8xf32, #tpu.memory_space<vmem>>, %arg4: memref<1x8x128xf32, #tpu.memory_space<vmem>>, %arg5: memref<1x8xf32, #tpu.memory_space<vmem>>) attributes {dimension_semantics = [#tpu.dimension_semantics<parallel>, #tpu.dimension_semantics<arbitrary>], iteration_bounds = array<i64: 1, 1>, scalar_prefetch = 0 : i64, scratch_operands = 1 : i64, tpu.core_type = #tpu.core_type<tc>, window_params = [{transform_indices = @transform_0, window_bounds = array<i64: 1, 128>}, {pipeline_mode = #tpu.pipeline_mode<synchronous>, transform_indices = @transform_1, window_bounds = array<i64: 128, 8>}, {transform_indices = @transform_2, window_bounds = array<i64: 1, 8, 128>}]} {
    %c0_i32 = arith.constant 0 : i32
    %0 = arith.cmpi eq, %arg1, %c0_i32 : i32
    %1 = arith.extui %0 : i1 to i32
    %c0_i32_0 = arith.constant 0 : i32
    %2 = arith.cmpi ne, %1, %c0_i32_0 : i32
    scf.if %2 {
      %cst_14 = arith.constant 0.000000e+00 : f32
      %21 = vector.broadcast %cst_14 : f32 to vector<1x8xf32>
      %c0_15 = arith.constant 0 : index
      %c0_16 = arith.constant 0 : index
      %22 = vector.load %arg5[%c0_15, %c0_16] : memref<1x8xf32, #tpu.memory_space<vmem>>, vector<1x8xf32>
      tpu.vector_store %arg5[%c0_15, %c0_16], %21 {strides = array<i32>} : memref<1x8xf32, #tpu.memory_space<vmem>>, vector<1x8xf32>,
    } else {
    }
    %c0 = arith.constant 0 : index
    %c0_1 = arith.constant 0 : index
    %3 = vector.load %arg2[%c0, %c0_1] : memref<1x128xf32, #tpu.memory_space<vmem>>, vector<1x128xf32>
    %c0_2 = arith.constant 0 : index
    %c0_3 = arith.constant 0 : index
    %4 = vector.load %arg3[%c0_2, %c0_3] : memref<128x8xf32, #tpu.memory_space<vmem>>, vector<128x8xf32>
    %cst = arith.constant dense<0.000000e+00> : vector<1x8xf32>
    %5 = tpu.matmul %3, %4, %cst {dimension_numbers = #tpu.dot_dimension_numbers<[1], [0], [0], [1], [0, 0, 1, 1], [], []>, precision = #tpu.contract_precision<fp32>} : vector<1x128xf32>, vector<128x8xf32>, vector<1x8xf32> -> vector<1x8xf32>
    %cst_4 = arith.constant 0.196349546 : f32
    %6 = vector.broadcast %cst_4 : f32 to vector<1x8xf32>
    %7 = arith.mulf %5, %6 : vector<1x8xf32>
    %8 = math.sin %7 : vector<1x8xf32>
    %cst_5 = arith.constant 9.99999974E-5 : f32
    %9 = vector.broadcast %cst_5 : f32 to vector<1x8xf32>
    %10 = arith.addf %8, %9 : vector<1x8xf32>
    %cst_6 = arith.constant 1.000000e+00 : f32
    %11 = vector.broadcast %cst_6 : f32 to vector<1x8xf32>
    %12 = arith.divf %11, %10 : vector<1x8xf32>
    %cst_7 = arith.constant 1.000000e+00 : f32
    %13 = vector.broadcast %cst_7 : f32 to vector<1x8xf32>
    %14 = arith.subf %12, %13 : vector<1x8xf32>
    %c0_8 = arith.constant 0 : index
    %c0_9 = arith.constant 0 : index
    %15 = vector.load %arg5[%c0_8, %c0_9] : memref<1x8xf32, #tpu.memory_space<vmem>>, vector<1x8xf32>
    %16 = arith.addf %15, %14 : vector<1x8xf32>
    %c0_10 = arith.constant 0 : index
    %c0_11 = arith.constant 0 : index
    %17 = vector.load %arg5[%c0_10, %c0_11] : memref<1x8xf32, #tpu.memory_space<vmem>>, vector<1x8xf32>
    tpu.vector_store %arg5[%c0_10, %c0_11], %16 {strides = array<i32>} : memref<1x8xf32, #tpu.memory_space<vmem>>, vector<1x8xf32>,
    %c0_i32_12 = arith.constant 0 : i32
    %18 = arith.cmpi eq, %arg1, %c0_i32_12 : i32
    %19 = arith.extui %18 : i1 to i32
    %c0_i32_13 = arith.constant 0 : i32
    %20 = arith.cmpi ne, %19, %c0_i32_13 : i32
    scf.if %20 {
      %c0_14 = arith.constant 0 : index
      %c0_15 = arith.constant 0 : index
      %21 = vector.load %arg5[%c0_14, %c0_15] : memref<1x8xf32, #tpu.memory_space<vmem>>, vector<1x8xf32>
      %22 = vector.shape_cast %21 : vector<1x8xf32> to vector<1x1x8xf32>
      %cst_16 = arith.constant dense<0.000000e+00> : vector<1xf32>
      %23 = vector.multi_reduction <add>, %22, %cst_16 [1, 2] : vector<1x1x8xf32> to vector<1xf32>
      %24 = vector.shape_cast %23 : vector<1xf32> to vector<1x1x1xf32>
      %25 = vector.extract %24[0, 0, 0] : f32 from vector<1x1x1xf32>
      %26 = tpu.iota {dimensions = array<i32: 1>} : vector<1x8x128xi32>
      %27 = tpu.iota {dimensions = array<i32: 2>} : vector<1x8x128xi32>
      %c0_i32_17 = arith.constant 0 : i32
      %28 = vector.broadcast %c0_i32_17 : i32 to vector<1x8x128xi32>
      %29 = arith.cmpi eq, %26, %28 : vector<1x8x128xi32>
      %c0_i32_18 = arith.constant 0 : i32
      %30 = vector.broadcast %c0_i32_18 : i32 to vector<1x8x128xi32>
      %31 = arith.cmpi eq, %27, %30 : vector<1x8x128xi32>
      %32 = arith.andi %29, %31 : vector<1x8x128xi1>
      %cst_19 = arith.constant 0.000000e+00 : f32
      %33 = vector.broadcast %25 : f32 to vector<1x8x128xf32>
      %34 = vector.broadcast %cst_19 : f32 to vector<1x8x128xf32>
      %35 = arith.select %32, %33, %34 : vector<1x8x128xi1>, vector<1x8x128xf32>
      %c0_20 = arith.constant 0 : index
      %c0_21 = arith.constant 0 : index
      %c0_22 = arith.constant 0 : index
      %36 = vector.load %arg4[%c0_20, %c0_21, %c0_22] : memref<1x8x128xf32, #tpu.memory_space<vmem>>, vector<1x8x128xf32>
      tpu.vector_store %arg4[%c0_20, %c0_21, %c0_22], %35 {strides = array<i32>} : memref<1x8x128xf32, #tpu.memory_space<vmem>>, vector<1x8x128xf32>,
    } else {
    }
    return
  }
  func.func @transform_0(%arg0: i32, %arg1: i32) -> (i32, i32) {
    %c1_i32 = arith.constant 1 : i32
    %0 = arith.muli %arg0, %c1_i32 : i32
    %1 = arith.addi %0, %arg1 : i32
    %c0_i32 = arith.constant 0 : i32
    %c0_i32_0 = arith.constant 0 : i32
    return %1, %c0_i32 : i32, i32
  }
  func.func @transform_1(%arg0: i32, %arg1: i32) -> (i32, i32) {
    %c0_i32 = arith.constant 0 : i32
    %c0_i32_0 = arith.constant 0 : i32
    %c0_i32_1 = arith.constant 0 : i32
    return %c0_i32, %c0_i32_0 : i32, i32
  }
  func.func @transform_2(%arg0: i32, %arg1: i32) -> (i32, i32, i32) {
    %c0_i32 = arith.constant 0 : i32
    %c0_i32_0 = arith.constant 0 : i32
    %c0_i32_1 = arith.constant 0 : i32
    return %arg0, %c0_i32, %c0_i32_0 : i32, i32, i32
  }
}

</mosaic_0001>

<llo_original>
// kernel: tpu_custom_call.1
$region0: #{tpu_custom_call.1}
  #allocation0 [shape = 'u32[]', space=smem, size = 0x4, offset = 0x4, fixed_abs, tag = 'smem constant byte address 0x4 - core index']
  #allocation1 [shape = 'u32[144,128]{1,0:T(1,128)}', space=vmem, size = 0x12000, scoped, tag = 'internal scratch']
  #allocation2 [shape = 'f32[1,8]{1,0:T(1,128)}', space=vmem, size = 0x200, scoped, tag = 'scratch operand']
  %s0 = inlined_call_operand.vmem [shape: f32[1,128], index: 0, kind: input, shape index: {}]
  %s1 = inlined_call_operand.vmem [shape: f32[128,8], index: 1, kind: input, shape index: {}]
  %s2 = inlined_call_operand.hbm [shape: f32[1,8,128], index: 2, kind: output, shape index: {}]
  %s3 = sld [smem:[#allocation0]]
  $region26: #{tpu_custom_call.1} parent=0
    _
  %s5 = ssub.s32 1, %s3
  %s6 = scalar_select 0, %s5, %s3
  $region1: #{tpu_custom_call.1} parent=0
    #allocation3 [shape = 'u8[4096]{0}', space=vmem, size = 0x1000, scoped, tag = 'output window, operand 0, single buffered']
    #allocation4 [shape = 's32[1]{0}', space=sflag, size = 0x4, scoped, tag = 'scoped memory for tpu_custom_call.1']
    %7 = vsyncpa [#allocation4], 0
    // Predicated region
    $region2: #{tpu_custom_call.1} parent=1 // pred_check
      _
    $region3: #{tpu_custom_call.1} parent=1 // pred_check_branch
      %9 = sbr.rel (0) target = $region5
    $region4: #{tpu_custom_call.1} parent=1 // pred_region
      %s10 = sadd.s32 0, 0
      %p11 = scmp.lt.s32.totalorder %s10, 0
      %s12 = scalar_select %p11, %s10, 0
      %s13 = scalar_lea.vmem %s0, %s12
      %s14 = sadd.s32 0, 0
    $region5: #{tpu_custom_call.1} parent=1 // pred_fallthru
      _
    // Predicated region
    $region6: #{tpu_custom_call.1} parent=1 // pred_check
      _
    $region7: #{tpu_custom_call.1} parent=1 // pred_check_branch
      %16 = sbr.rel (0) target = $region9
    $region8: #{tpu_custom_call.1} parent=1 // pred_region
      _
    $region9: #{tpu_custom_call.1} parent=1 // pred_fallthru
      _
    %s17 = sadd.s32 0, 0
    %p18 = scmp.lt.s32.totalorder %s17, 0
    %s19 = scalar_select %p18, %s17, 0
    %s20 = scalar_lea.vmem %s0, %s19
    %s21 = sadd.s32 0, 0
    %p22 = scmp.lt.s32.totalorder %s21, 0
    %s23 = scalar_select %p22, %s21, 0
    %s24 = scalar_lea.vmem %s0, %s23
    %s25 = sadd.s32 0, 0
    %p26 = scmp.eq.s32.totalorder 0, 0
    // Predicated region
    $region10: #{tpu_custom_call.1} parent=1 // pred_check
      %p27 = pneg %p26
    $region11: #{tpu_custom_call.1} parent=1 // pred_check_branch
      %29 = sbr.rel (%p27) target = $region13
    $region12: #{tpu_custom_call.1} parent=1 // pred_region
      %vm30 = vcmask 57344
      %31 = vst.msk [vmem:[#allocation2] sm:$0x1] %vm30, 0.0
    $region13: #{tpu_custom_call.1} parent=1 // pred_fallthru
      _
    %v32 = vld [vmem:[%s24] sm:$0x1]
    %v33 = vld [vmem:[%s1] sm:$0xff]
    %v34 = vld [vmem:[%s1 + $0x8] sm:$0xff]
    %v35 = vld [vmem:[%s1 + $0x10] sm:$0xff]
    %v36 = vld [vmem:[%s1 + $0x18] sm:$0xff]
    %v37 = vld [vmem:[%s1 + $0x20] sm:$0xff]
    %v38 = vld [vmem:[%s1 + $0x28] sm:$0xff]
    %v39 = vld [vmem:[%s1 + $0x30] sm:$0xff]
    %v40 = vld [vmem:[%s1 + $0x38] sm:$0xff]
    %v41 = vld [vmem:[%s1 + $0x40] sm:$0xff]
    %v42 = vld [vmem:[%s1 + $0x48] sm:$0xff]
    %v43 = vld [vmem:[%s1 + $0x50] sm:$0xff]
    %v44 = vld [vmem:[%s1 + $0x58] sm:$0xff]
    %v45 = vld [vmem:[%s1 + $0x60] sm:$0xff]
    %v46 = vld [vmem:[%s1 + $0x68] sm:$0xff]
    %v47 = vld [vmem:[%s1 + $0x70] sm:$0xff]
    %v48 = vld [vmem:[%s1 + $0x78] sm:$0xff]
    %49 = vmatprep.subr.mxu0 0.0
    %v50 = vand.u32 %v33, 4294901760
    %51 = vmatpush1.msra.mxu0 %v50
    %52 = vmatprep.subr.mxu0 0.0
    %v53 = vand.u32 %v34, 4294901760
    %54 = vmatpush1.msra.mxu0 %v53
    %55 = vmatprep.subr.mxu0 0.0
    %v56 = vand.u32 %v35, 4294901760
    %57 = vmatpush1.msra.mxu0 %v56
    %58 = vmatprep.subr.mxu0 0.0
    %v59 = vand.u32 %v36, 4294901760
    %60 = vmatpush1.msra.mxu0 %v59
    %61 = vmatprep.subr.mxu0 0.0
    %v62 = vand.u32 %v37, 4294901760
    %63 = vmatpush1.msra.mxu0 %v62
    %64 = vmatprep.subr.mxu0 0.0
    %v65 = vand.u32 %v38, 4294901760
    %66 = vmatpush1.msra.mxu0 %v65
    %67 = vmatprep.subr.mxu0 0.0
    %v68 = vand.u32 %v39, 4294901760
    %69 = vmatpush1.msra.mxu0 %v68
    %70 = vmatprep.subr.mxu0 0.0
    %v71 = vand.u32 %v40, 4294901760
    %72 = vmatpush1.msra.mxu0 %v71
    %73 = vmatprep.subr.mxu0 0.0
    %v74 = vand.u32 %v41, 4294901760
    %75 = vmatpush1.msra.mxu0 %v74
    %76 = vmatprep.subr.mxu0 0.0
    %v77 = vand.u32 %v42, 4294901760
    %78 = vmatpush1.msra.mxu0 %v77
    %79 = vmatprep.subr.mxu0 0.0
    %v80 = vand.u32 %v43, 4294901760
    %81 = vmatpush1.msra.mxu0 %v80
    %82 = vmatprep.subr.mxu0 0.0
    %v83 = vand.u32 %v44, 4294901760
    %84 = vmatpush1.msra.mxu0 %v83
    %85 = vmatprep.subr.mxu0 0.0
    %v86 = vand.u32 %v45, 4294901760
    %87 = vmatpush1.msra.mxu0 %v86
    %88 = vmatprep.subr.mxu0 0.0
    %v89 = vand.u32 %v46, 4294901760
    %90 = vmatpush1.msra.mxu0 %v89
    %91 = vmatprep.subr.mxu0 0.0
    %v92 = vand.u32 %v47, 4294901760
    %93 = vmatpush1.msra.mxu0 %v92
    %94 = vmatprep.subr.mxu0 0.0
    %v95 = vand.u32 %v48, 4294901760
    %96 = vmatpush1.msra.mxu0 %v95
    %97 = vmatprep.subr.mxu0 0.0
    %98 = vmatpush1.msra.mxu0 0.0
    %99 = vmatprep.subr.mxu0 0.0
    %100 = vmatpush1.msra.mxu0 0.0
    %101 = vmatprep.subr.mxu0 0.0
    %102 = vmatpush1.msra.mxu0 0.0
    %103 = vmatprep.subr.mxu0 0.0
    %104 = vmatpush1.msra.mxu0 0.0
    %105 = vmatprep.subr.mxu0 0.0
    %106 = vmatpush1.msra.mxu0 0.0
    %107 = vmatprep.subr.mxu0 0.0
    %108 = vmatpush1.msra.mxu0 0.0
    %109 = vmatprep.subr.mxu0 0.0
    %110 = vmatpush1.msra.mxu0 0.0
    %111 = vmatprep.subr.mxu0 0.0
    %112 = vmatpush1.msra.mxu0 0.0
    %113 = vmatprep.subr.mxu0 0.0
    %114 = vmatpush1.msra.mxu0 0.0
    %115 = vmatprep.subr.mxu0 0.0
    %116 = vmatpush1.msra.mxu0 0.0
    %117 = vmatprep.subr.mxu0 0.0
    %118 = vmatpush1.msra.mxu0 0.0
    %119 = vmatprep.subr.mxu0 0.0
    %120 = vmatpush1.msra.mxu0 0.0
    %121 = vmatprep.subr.mxu0 0.0
    %122 = vmatpush1.msra.mxu0 0.0
    %123 = vmatprep.subr.mxu0 0.0
    %124 = vmatpush1.msra.mxu0 0.0
    %125 = vmatprep.subr.mxu0 0.0
    %126 = vmatpush1.msra.mxu0 0.0
    %127 = vmatprep.subr.mxu0 0.0
    %128 = vmatpush1.msra.mxu0 0.0
    %129 = vmatprep.mubr.f32.mxu0 0.0
    %v130 = vand.u32 %v32, 4294901760
    %v131 = vsub.f32 %v32, %v130
    %v132 = vand.u32 %v131, 4294901760
    %v133 = vsub.f32 %v131, %v132
    %v134 = vand.u32 %v133, 4294901760
    %135 = vmatmul.mubr.f32.gmra.mrb[0].mxu0 %v134
    %v136 = vpop.f32.mrb[0].mxu0
    %v137 = vadd.f32 0.0, %v136
    %v138 = vpop.f32.mrb[0].mxu0
    %139 = vdwg.mxu0
    %140 = vmatprep.subr.mxu0 0.0
    %v141 = vand.u32 %v33, 4294901760
    %v142 = vsub.f32 %v33, %v141
    %v143 = vand.u32 %v142, 4294901760
    %v144 = vsub.f32 %v142, %v143
    %v145 = vand.u32 %v144, 4294901760
    %146 = vmatpush1.msra.mxu0 %v145
    %147 = vmatprep.subr.mxu0 0.0
    %v148 = vand.u32 %v34, 4294901760
    %v149 = vsub.f32 %v34, %v148
    %v150 = vand.u32 %v149, 4294901760
    %v151 = vsub.f32 %v149, %v150
    %v152 = vand.u32 %v151, 4294901760
    %153 = vmatpush1.msra.mxu0 %v152
    %154 = vmatprep.subr.mxu0 0.0
    %v155 = vand.u32 %v35, 4294901760
    %v156 = vsub.f32 %v35, %v155
    %v157 = vand.u32 %v156, 4294901760
    %v158 = vsub.f32 %v156, %v157
    %v159 = vand.u32 %v158, 4294901760
    %160 = vmatpush1.msra.mxu0 %v159
    %161 = vmatprep.subr.mxu0 0.0
    %v162 = vand.u32 %v36, 4294901760
    %v163 = vsub.f32 %v36, %v162
    %v164 = vand.u32 %v163, 4294901760
    %v165 = vsub.f32 %v163, %v164
    %v166 = vand.u32 %v165, 4294901760
    %167 = vmatpush1.msra.mxu0 %v166
    %168 = vmatprep.subr.mxu0 0.0
    %v169 = vand.u32 %v37, 4294901760
    %v170 = vsub.f32 %v37, %v169
    %v171 = vand.u32 %v170, 4294901760
    %v172 = vsub.f32 %v170, %v171
    %v173 = vand.u32 %v172, 4294901760
    %174 = vmatpush1.msra.mxu0 %v173
    %175 = vmatprep.subr.mxu0 0.0
    %v176 = vand.u32 %v38, 4294901760
    %v177 = vsub.f32 %v38, %v176
    %v178 = vand.u32 %v177, 4294901760
    %v179 = vsub.f32 %v177, %v178
    %v180 = vand.u32 %v179, 4294901760
    %181 = vmatpush1.msra.mxu0 %v180
    %182 = vmatprep.subr.mxu0 0.0
    %v183 = vand.u32 %v39, 4294901760
    %v184 = vsub.f32 %v39, %v183
    %v185 = vand.u32 %v184, 4294901760
    %v186 = vsub.f32 %v184, %v185
    %v187 = vand.u32 %v186, 4294901760
    %188 = vmatpush1.msra.mxu0 %v187
    %189 = vmatprep.subr.mxu0 0.0
    %v190 = vand.u32 %v40, 4294901760
    %v191 = vsub.f32 %v40, %v190
    %v192 = vand.u32 %v191, 4294901760
    %v193 = vsub.f32 %v191, %v192
    %v194 = vand.u32 %v193, 4294901760
    %195 = vmatpush1.msra.mxu0 %v194
    %196 = vmatprep.subr.mxu0 0.0
    %v197 = vand.u32 %v41, 4294901760
    %v198 = vsub.f32 %v41, %v197
    %v199 = vand.u32 %v198, 4294901760
    %v200 = vsub.f32 %v198, %v199
    %v201 = vand.u32 %v200, 4294901760
    %202 = vmatpush1.msra.mxu0 %v201
    %203 = vmatprep.subr.mxu0 0.0
    %v204 = vand.u32 %v42, 4294901760
    %v205 = vsub.f32 %v42, %v204
    %v206 = vand.u32 %v205, 4294901760
    %v207 = vsub.f32 %v205, %v206
    %v208 = vand.u32 %v207, 4294901760
    %209 = vmatpush1.msra.mxu0 %v208
    %210 = vmatprep.subr.mxu0 0.0
    %v211 = vand.u32 %v43, 4294901760
    %v212 = vsub.f32 %v43, %v211
    %v213 = vand.u32 %v212, 4294901760
    %v214 = vsub.f32 %v212, %v213
    %v215 = vand.u32 %v214, 4294901760
    %216 = vmatpush1.msra.mxu0 %v215
    %217 = vmatprep.subr.mxu0 0.0
    %v218 = vand.u32 %v44, 4294901760
    %v219 = vsub.f32 %v44, %v218
    %v220 = vand.u32 %v219, 4294901760
    %v221 = vsub.f32 %v219, %v220
    %v222 = vand.u32 %v221, 4294901760
    %223 = vmatpush1.msra.mxu0 %v222
    %224 = vmatprep.subr.mxu0 0.0
    %v225 = vand.u32 %v45, 4294901760
    %v226 = vsub.f32 %v45, %v225
    %v227 = vand.u32 %v226, 4294901760
    %v228 = vsub.f32 %v226, %v227
    %v229 = vand.u32 %v228, 4294901760
    %230 = vmatpush1.msra.mxu0 %v229
    %231 = vmatprep.subr.mxu0 0.0
    %v232 = vand.u32 %v46, 4294901760
    %v233 = vsub.f32 %v46, %v232
    %v234 = vand.u32 %v233, 4294901760
    %v235 = vsub.f32 %v233, %v234
    %v236 = vand.u32 %v235, 4294901760
    %237 = vmatpush1.msra.mxu0 %v236
    %238 = vmatprep.subr.mxu0 0.0
    %v239 = vand.u32 %v47, 4294901760
    %v240 = vsub.f32 %v47, %v239
    %v241 = vand.u32 %v240, 4294901760
    %v242 = vsub.f32 %v240, %v241
    %v243 = vand.u32 %v242, 4294901760
    %244 = vmatpush1.msra.mxu0 %v243
    %245 = vmatprep.subr.mxu0 0.0
    %v246 = vand.u32 %v48, 4294901760
    %v247 = vsub.f32 %v48, %v246
    %v248 = vand.u32 %v247, 4294901760
    %v249 = vsub.f32 %v247, %v248
    %v250 = vand.u32 %v249, 4294901760
    %251 = vmatpush1.msra.mxu0 %v250
    %252 = vmatprep.subr.mxu0 0.0
    %253 = vmatpush1.msra.mxu0 0.0
    %254 = vmatprep.subr.mxu0 0.0
    %255 = vmatpush1.msra.mxu0 0.0
    %256 = vmatprep.subr.mxu0 0.0
    %257 = vmatpush1.msra.mxu0 0.0
    %258 = vmatprep.subr.mxu0 0.0
    %259 = vmatpush1.msra.mxu0 0.0
    %260 = vmatprep.subr.mxu0 0.0
    %261 = vmatpush1.msra.mxu0 0.0
    %262 = vmatprep.subr.mxu0 0.0
    %263 = vmatpush1.msra.mxu0 0.0
    %264 = vmatprep.subr.mxu0 0.0
    %265 = vmatpush1.msra.mxu0 0.0
    %266 = vmatprep.subr.mxu0 0.0
    %267 = vmatpush1.msra.mxu0 0.0
    %268 = vmatprep.subr.mxu0 0.0
    %269 = vmatpush1.msra.mxu0 0.0
    %270 = vmatprep.subr.mxu0 0.0
    %271 = vmatpush1.msra.mxu0 0.0
    %272 = vmatprep.subr.mxu0 0.0
    %273 = vmatpush1.msra.mxu0 0.0
    %274 = vmatprep.subr.mxu0 0.0
    %275 = vmatpush1.msra.mxu0 0.0
    %276 = vmatprep.subr.mxu0 0.0
    %277 = vmatpush1.msra.mxu0 0.0
    %278 = vmatprep.subr.mxu0 0.0
    %279 = vmatpush1.msra.mxu0 0.0
    %280 = vmatprep.subr.mxu0 0.0
    %281 = vmatpush1.msra.mxu0 0.0
    %282 = vmatprep.subr.mxu0 0.0
    %283 = vmatpush1.msra.mxu0 0.0
    %284 = vmatprep.mubr.f32.mxu0 0.0
    %v285 = vand.u32 %v32, 4294901760
    %286 = vmatmul.mubr.f32.gmra.mrb[0].mxu0 %v285
    %v287 = vpop.f32.mrb[0].mxu0
    %v288 = vadd.f32 %v137, %v287
    %v289 = vpop.f32.mrb[0].mxu0
    %290 = vdwg.mxu0
    %291 = vmatprep.subr.mxu0 0.0
    %v292 = vand.u32 %v33, 4294901760
    %v293 = vsub.f32 %v33, %v292
    %294 = vmatpush1.msra.mxu0 %v293
    %295 = vmatprep.subr.mxu0 0.0
    %v296 = vand.u32 %v34, 4294901760
    %v297 = vsub.f32 %v34, %v296
    %298 = vmatpush1.msra.mxu0 %v297
    %299 = vmatprep.subr.mxu0 0.0
    %v300 = vand.u32 %v35, 4294901760
    %v301 = vsub.f32 %v35, %v300
    %302 = vmatpush1.msra.mxu0 %v301
    %303 = vmatprep.subr.mxu0 0.0
    %v304 = vand.u32 %v36, 4294901760
    %v305 = vsub.f32 %v36, %v304
    %306 = vmatpush1.msra.mxu0 %v305
    %307 = vmatprep.subr.mxu0 0.0
    %v308 = vand.u32 %v37, 4294901760
    %v309 = vsub.f32 %v37, %v308
    %310 = vmatpush1.msra.mxu0 %v309
    %311 = vmatprep.subr.mxu0 0.0
    %v312 = vand.u32 %v38, 4294901760
    %v313 = vsub.f32 %v38, %v312
    %314 = vmatpush1.msra.mxu0 %v313
    %315 = vmatprep.subr.mxu0 0.0
    %v316 = vand.u32 %v39, 4294901760
    %v317 = vsub.f32 %v39, %v316
    %318 = vmatpush1.msra.mxu0 %v317
    %319 = vmatprep.subr.mxu0 0.0
    %v320 = vand.u32 %v40, 4294901760
    %v321 = vsub.f32 %v40, %v320
    %322 = vmatpush1.msra.mxu0 %v321
    %323 = vmatprep.subr.mxu0 0.0
    %v324 = vand.u32 %v41, 4294901760
    %v325 = vsub.f32 %v41, %v324
    %326 = vmatpush1.msra.mxu0 %v325
    %327 = vmatprep.subr.mxu0 0.0
    %v328 = vand.u32 %v42, 4294901760
    %v329 = vsub.f32 %v42, %v328
    %330 = vmatpush1.msra.mxu0 %v329
    %331 = vmatprep.subr.mxu0 0.0
    %v332 = vand.u32 %v43, 4294901760
    %v333 = vsub.f32 %v43, %v332
    %334 = vmatpush1.msra.mxu0 %v333
    %335 = vmatprep.subr.mxu0 0.0
    %v336 = vand.u32 %v44, 4294901760
    %v337 = vsub.f32 %v44, %v336
    %338 = vmatpush1.msra.mxu0 %v337
    %339 = vmatprep.subr.mxu0 0.0
    %v340 = vand.u32 %v45, 4294901760
    %v341 = vsub.f32 %v45, %v340
    %342 = vmatpush1.msra.mxu0 %v341
    %343 = vmatprep.subr.mxu0 0.0
    %v344 = vand.u32 %v46, 4294901760
    %v345 = vsub.f32 %v46, %v344
    %346 = vmatpush1.msra.mxu0 %v345
    %347 = vmatprep.subr.mxu0 0.0
    %v348 = vand.u32 %v47, 4294901760
    %v349 = vsub.f32 %v47, %v348
    %350 = vmatpush1.msra.mxu0 %v349
    %351 = vmatprep.subr.mxu0 0.0
    %v352 = vand.u32 %v48, 4294901760
    %v353 = vsub.f32 %v48, %v352
    %354 = vmatpush1.msra.mxu0 %v353
    %355 = vmatprep.subr.mxu0 0.0
    %356 = vmatpush1.msra.mxu0 0.0
    %357 = vmatprep.subr.mxu0 0.0
    %358 = vmatpush1.msra.mxu0 0.0
    %359 = vmatprep.subr.mxu0 0.0
    %360 = vmatpush1.msra.mxu0 0.0
    %361 = vmatprep.subr.mxu0 0.0
    %362 = vmatpush1.msra.mxu0 0.0
    %363 = vmatprep.subr.mxu0 0.0
    %364 = vmatpush1.msra.mxu0 0.0
    %365 = vmatprep.subr.mxu0 0.0
    %366 = vmatpush1.msra.mxu0 0.0
    %367 = vmatprep.subr.mxu0 0.0
    %368 = vmatpush1.msra.mxu0 0.0
    %369 = vmatprep.subr.mxu0 0.0
    %370 = vmatpush1.msra.mxu0 0.0
    %371 = vmatprep.subr.mxu0 0.0
    %372 = vmatpush1.msra.mxu0 0.0
    %373 = vmatprep.subr.mxu0 0.0
    %374 = vmatpush1.msra.mxu0 0.0
    %375 = vmatprep.subr.mxu0 0.0
    %376 = vmatpush1.msra.mxu0 0.0
    %377 = vmatprep.subr.mxu0 0.0
    %378 = vmatpush1.msra.mxu0 0.0
    %379 = vmatprep.subr.mxu0 0.0
    %380 = vmatpush1.msra.mxu0 0.0
    %381 = vmatprep.subr.mxu0 0.0
    %382 = vmatpush1.msra.mxu0 0.0
    %383 = vmatprep.subr.mxu0 0.0
    %384 = vmatpush1.msra.mxu0 0.0
    %385 = vmatprep.subr.mxu0 0.0
    %386 = vmatpush1.msra.mxu0 0.0
    %387 = vmatprep.mubr.f32.mxu0 0.0
    %v388 = vand.u32 %v32, 4294901760
    %v389 = vsub.f32 %v32, %v388
    %390 = vmatmul.mubr.f32.gmra.mrb[0].mxu0 %v389
    %v391 = vpop.f32.mrb[0].mxu0
    %v392 = vadd.f32 %v288, %v391
    %v393 = vpop.f32.mrb[0].mxu0
    %394 = vdwg.mxu0
    %395 = vmatprep.subr.mxu0 0.0
    %v396 = vand.u32 %v33, 4294901760
    %397 = vmatpush1.msra.mxu0 %v396
    %398 = vmatprep.subr.mxu0 0.0
    %v399 = vand.u32 %v34, 4294901760
    %400 = vmatpush1.msra.mxu0 %v399
    %401 = vmatprep.subr.mxu0 0.0
    %v402 = vand.u32 %v35, 4294901760
    %403 = vmatpush1.msra.mxu0 %v402
    %404 = vmatprep.subr.mxu0 0.0
    %v405 = vand.u32 %v36, 4294901760
    %406 = vmatpush1.msra.mxu0 %v405
    %407 = vmatprep.subr.mxu0 0.0
    %v408 = vand.u32 %v37, 4294901760
    %409 = vmatpush1.msra.mxu0 %v408
    %410 = vmatprep.subr.mxu0 0.0
    %v411 = vand.u32 %v38, 4294901760
    %412 = vmatpush1.msra.mxu0 %v411
    %413 = vmatprep.subr.mxu0 0.0
    %v414 = vand.u32 %v39, 4294901760
    %415 = vmatpush1.msra.mxu0 %v414
    %416 = vmatprep.subr.mxu0 0.0
    %v417 = vand.u32 %v40, 4294901760
    %418 = vmatpush1.msra.mxu0 %v417
    %419 = vmatprep.subr.mxu0 0.0
    %v420 = vand.u32 %v41, 4294901760
    %421 = vmatpush1.msra.mxu0 %v420
    %422 = vmatprep.subr.mxu0 0.0
    %v423 = vand.u32 %v42, 4294901760
    %424 = vmatpush1.msra.mxu0 %v423
    %425 = vmatprep.subr.mxu0 0.0
    %v426 = vand.u32 %v43, 4294901760
    %427 = vmatpush1.msra.mxu0 %v426
    %428 = vmatprep.subr.mxu0 0.0
    %v429 = vand.u32 %v44, 4294901760
    %430 = vmatpush1.msra.mxu0 %v429
    %431 = vmatprep.subr.mxu0 0.0
    %v432 = vand.u32 %v45, 4294901760
    %433 = vmatpush1.msra.mxu0 %v432
    %434 = vmatprep.subr.mxu0 0.0
    %v435 = vand.u32 %v46, 4294901760
    %436 = vmatpush1.msra.mxu0 %v435
    %437 = vmatprep.subr.mxu0 0.0
    %v438 = vand.u32 %v47, 4294901760
    %439 = vmatpush1.msra.mxu0 %v438
    %440 = vmatprep.subr.mxu0 0.0
    %v441 = vand.u32 %v48, 4294901760
    %442 = vmatpush1.msra.mxu0 %v441
    %443 = vmatprep.subr.mxu0 0.0
    %444 = vmatpush1.msra.mxu0 0.0
    %445 = vmatprep.subr.mxu0 0.0
    %446 = vmatpush1.msra.mxu0 0.0
    %447 = vmatprep.subr.mxu0 0.0
    %448 = vmatpush1.msra.mxu0 0.0
    %449 = vmatprep.subr.mxu0 0.0
    %450 = vmatpush1.msra.mxu0 0.0
    %451 = vmatprep.subr.mxu0 0.0
    %452 = vmatpush1.msra.mxu0 0.0
    %453 = vmatprep.subr.mxu0 0.0
    %454 = vmatpush1.msra.mxu0 0.0
    %455 = vmatprep.subr.mxu0 0.0
    %456 = vmatpush1.msra.mxu0 0.0
    %457 = vmatprep.subr.mxu0 0.0
    %458 = vmatpush1.msra.mxu0 0.0
    %459 = vmatprep.subr.mxu0 0.0
    %460 = vmatpush1.msra.mxu0 0.0
    %461 = vmatprep.subr.mxu0 0.0
    %462 = vmatpush1.msra.mxu0 0.0
    %463 = vmatprep.subr.mxu0 0.0
    %464 = vmatpush1.msra.mxu0 0.0
    %465 = vmatprep.subr.mxu0 0.0
    %466 = vmatpush1.msra.mxu0 0.0
    %467 = vmatprep.subr.mxu0 0.0
    %468 = vmatpush1.msra.mxu0 0.0
    %469 = vmatprep.subr.mxu0 0.0
    %470 = vmatpush1.msra.mxu0 0.0
    %471 = vmatprep.subr.mxu0 0.0
    %472 = vmatpush1.msra.mxu0 0.0
    %473 = vmatprep.subr.mxu0 0.0
    %474 = vmatpush1.msra.mxu0 0.0
    %475 = vmatprep.mubr.f32.mxu0 0.0
    %v476 = vand.u32 %v32, 4294901760
    %v477 = vsub.f32 %v32, %v476
    %v478 = vand.u32 %v477, 4294901760
    %479 = vmatmul.mubr.f32.gmra.mrb[0].mxu0 %v478
    %v480 = vpop.f32.mrb[0].mxu0
    %v481 = vadd.f32 %v392, %v480
    %v482 = vpop.f32.mrb[0].mxu0
    %483 = vdwg.mxu0
    %484 = vmatprep.subr.mxu0 0.0
    %v485 = vand.u32 %v33, 4294901760
    %v486 = vsub.f32 %v33, %v485
    %v487 = vand.u32 %v486, 4294901760
    %488 = vmatpush1.msra.mxu0 %v487
    %489 = vmatprep.subr.mxu0 0.0
    %v490 = vand.u32 %v34, 4294901760
    %v491 = vsub.f32 %v34, %v490
    %v492 = vand.u32 %v491, 4294901760
    %493 = vmatpush1.msra.mxu0 %v492
    %494 = vmatprep.subr.mxu0 0.0
    %v495 = vand.u32 %v35, 4294901760
    %v496 = vsub.f32 %v35, %v495
    %v497 = vand.u32 %v496, 4294901760
    %498 = vmatpush1.msra.mxu0 %v497
    %499 = vmatprep.subr.mxu0 0.0
    %v500 = vand.u32 %v36, 4294901760
    %v501 = vsub.f32 %v36, %v500
    %v502 = vand.u32 %v501, 4294901760
    %503 = vmatpush1.msra.mxu0 %v502
    %504 = vmatprep.subr.mxu0 0.0
    %v505 = vand.u32 %v37, 4294901760
    %v506 = vsub.f32 %v37, %v505
    %v507 = vand.u32 %v506, 4294901760
    %508 = vmatpush1.msra.mxu0 %v507
    %509 = vmatprep.subr.mxu0 0.0
    %v510 = vand.u32 %v38, 4294901760
    %v511 = vsub.f32 %v38, %v510
    %v512 = vand.u32 %v511, 4294901760
    %513 = vmatpush1.msra.mxu0 %v512
    %514 = vmatprep.subr.mxu0 0.0
    %v515 = vand.u32 %v39, 4294901760
    %v516 = vsub.f32 %v39, %v515
    %v517 = vand.u32 %v516, 4294901760
    %518 = vmatpush1.msra.mxu0 %v517
    %519 = vmatprep.subr.mxu0 0.0
    %v520 = vand.u32 %v40, 4294901760
    %v521 = vsub.f32 %v40, %v520
    %v522 = vand.u32 %v521, 4294901760
    %523 = vmatpush1.msra.mxu0 %v522
    %524 = vmatprep.subr.mxu0 0.0
    %v525 = vand.u32 %v41, 4294901760
    %v526 = vsub.f32 %v41, %v525
    %v527 = vand.u32 %v526, 4294901760
    %528 = vmatpush1.msra.mxu0 %v527
    %529 = vmatprep.subr.mxu0 0.0
    %v530 = vand.u32 %v42, 4294901760
    %v531 = vsub.f32 %v42, %v530
    %v532 = vand.u32 %v531, 4294901760
    %533 = vmatpush1.msra.mxu0 %v532
    %534 = vmatprep.subr.mxu0 0.0
    %v535 = vand.u32 %v43, 4294901760
    %v536 = vsub.f32 %v43, %v535
    %v537 = vand.u32 %v536, 4294901760
    %538 = vmatpush1.msra.mxu0 %v537
    %539 = vmatprep.subr.mxu0 0.0
    %v540 = vand.u32 %v44, 4294901760
    %v541 = vsub.f32 %v44, %v540
    %v542 = vand.u32 %v541, 4294901760
    %543 = vmatpush1.msra.mxu0 %v542
    %544 = vmatprep.subr.mxu0 0.0
    %v545 = vand.u32 %v45, 4294901760
    %v546 = vsub.f32 %v45, %v545
    %v547 = vand.u32 %v546, 4294901760
    %548 = vmatpush1.msra.mxu0 %v547
    %549 = vmatprep.subr.mxu0 0.0
    %v550 = vand.u32 %v46, 4294901760
    %v551 = vsub.f32 %v46, %v550
    %v552 = vand.u32 %v551, 4294901760
    %553 = vmatpush1.msra.mxu0 %v552
    %554 = vmatprep.subr.mxu0 0.0
    %v555 = vand.u32 %v47, 4294901760
    %v556 = vsub.f32 %v47, %v555
    %v557 = vand.u32 %v556, 4294901760
    %558 = vmatpush1.msra.mxu0 %v557
    %559 = vmatprep.subr.mxu0 0.0
    %v560 = vand.u32 %v48, 4294901760
    %v561 = vsub.f32 %v48, %v560
    %v562 = vand.u32 %v561, 4294901760
    %563 = vmatpush1.msra.mxu0 %v562
    %564 = vmatprep.subr.mxu0 0.0
    %565 = vmatpush1.msra.mxu0 0.0
    %566 = vmatprep.subr.mxu0 0.0
    %567 = vmatpush1.msra.mxu0 0.0
    %568 = vmatprep.subr.mxu0 0.0
    %569 = vmatpush1.msra.mxu0 0.0
    %570 = vmatprep.subr.mxu0 0.0
    %571 = vmatpush1.msra.mxu0 0.0
    %572 = vmatprep.subr.mxu0 0.0
    %573 = vmatpush1.msra.mxu0 0.0
    %574 = vmatprep.subr.mxu0 0.0
    %575 = vmatpush1.msra.mxu0 0.0
    %576 = vmatprep.subr.mxu0 0.0
    %577 = vmatpush1.msra.mxu0 0.0
    %578 = vmatprep.subr.mxu0 0.0
    %579 = vmatpush1.msra.mxu0 0.0
    %580 = vmatprep.subr.mxu0 0.0
    %581 = vmatpush1.msra.mxu0 0.0
    %582 = vmatprep.subr.mxu0 0.0
    %583 = vmatpush1.msra.mxu0 0.0
    %584 = vmatprep.subr.mxu0 0.0
    %585 = vmatpush1.msra.mxu0 0.0
    %586 = vmatprep.subr.mxu0 0.0
    %587 = vmatpush1.msra.mxu0 0.0
    %588 = vmatprep.subr.mxu0 0.0
    %589 = vmatpush1.msra.mxu0 0.0
    %590 = vmatprep.subr.mxu0 0.0
    %591 = vmatpush1.msra.mxu0 0.0
    %592 = vmatprep.subr.mxu0 0.0
    %593 = vmatpush1.msra.mxu0 0.0
    %594 = vmatprep.subr.mxu0 0.0
    %595 = vmatpush1.msra.mxu0 0.0
    %596 = vmatprep.mubr.f32.mxu0 0.0
    %v597 = vand.u32 %v32, 4294901760
    %598 = vmatmul.mubr.f32.gmra.mrb[0].mxu0 %v597
    %v599 = vpop.f32.mrb[0].mxu0
    %v600 = vadd.f32 %v481, %v599
    %v601 = vpop.f32.mrb[0].mxu0
    %602 = vdwg.mxu0
    %603 = vmatprep.subr.mxu0 0.0
    %v604 = vand.u32 %v33, 4294901760
    %605 = vmatpush1.msra.mxu0 %v604
    %606 = vmatprep.subr.mxu0 0.0
    %v607 = vand.u32 %v34, 4294901760
    %608 = vmatpush1.msra.mxu0 %v607
    %609 = vmatprep.subr.mxu0 0.0
    %v610 = vand.u32 %v35, 4294901760
    %611 = vmatpush1.msra.mxu0 %v610
    %612 = vmatprep.subr.mxu0 0.0
    %v613 = vand.u32 %v36, 4294901760
    %614 = vmatpush1.msra.mxu0 %v613
    %615 = vmatprep.subr.mxu0 0.0
    %v616 = vand.u32 %v37, 4294901760
    %617 = vmatpush1.msra.mxu0 %v616
    %618 = vmatprep.subr.mxu0 0.0
    %v619 = vand.u32 %v38, 4294901760
    %620 = vmatpush1.msra.mxu0 %v619
    %621 = vmatprep.subr.mxu0 0.0
    %v622 = vand.u32 %v39, 4294901760
    %623 = vmatpush1.msra.mxu0 %v622
    %624 = vmatprep.subr.mxu0 0.0
    %v625 = vand.u32 %v40, 4294901760
    %626 = vmatpush1.msra.mxu0 %v625
    %627 = vmatprep.subr.mxu0 0.0
    %v628 = vand.u32 %v41, 4294901760
    %629 = vmatpush1.msra.mxu0 %v628
    %630 = vmatprep.subr.mxu0 0.0
    %v631 = vand.u32 %v42, 4294901760
    %632 = vmatpush1.msra.mxu0 %v631
    %633 = vmatprep.subr.mxu0 0.0
    %v634 = vand.u32 %v43, 4294901760
    %635 = vmatpush1.msra.mxu0 %v634
    %636 = vmatprep.subr.mxu0 0.0
    %v637 = vand.u32 %v44, 4294901760
    %638 = vmatpush1.msra.mxu0 %v637
    %639 = vmatprep.subr.mxu0 0.0
    %v640 = vand.u32 %v45, 4294901760
    %641 = vmatpush1.msra.mxu0 %v640
    %642 = vmatprep.subr.mxu0 0.0
    %v643 = vand.u32 %v46, 4294901760
    %644 = vmatpush1.msra.mxu0 %v643
    %645 = vmatprep.subr.mxu0 0.0
    %v646 = vand.u32 %v47, 4294901760
    %647 = vmatpush1.msra.mxu0 %v646
    %648 = vmatprep.subr.mxu0 0.0
    %v649 = vand.u32 %v48, 4294901760
    %650 = vmatpush1.msra.mxu0 %v649
    %651 = vmatprep.subr.mxu0 0.0
    %652 = vmatpush1.msra.mxu0 0.0
    %653 = vmatprep.subr.mxu0 0.0
    %654 = vmatpush1.msra.mxu0 0.0
    %655 = vmatprep.subr.mxu0 0.0
    %656 = vmatpush1.msra.mxu0 0.0
    %657 = vmatprep.subr.mxu0 0.0
    %658 = vmatpush1.msra.mxu0 0.0
    %659 = vmatprep.subr.mxu0 0.0
    %660 = vmatpush1.msra.mxu0 0.0
    %661 = vmatprep.subr.mxu0 0.0
    %662 = vmatpush1.msra.mxu0 0.0
    %663 = vmatprep.subr.mxu0 0.0
    %664 = vmatpush1.msra.mxu0 0.0
    %665 = vmatprep.subr.mxu0 0.0
    %666 = vmatpush1.msra.mxu0 0.0
    %667 = vmatprep.subr.mxu0 0.0
    %668 = vmatpush1.msra.mxu0 0.0
    %669 = vmatprep.subr.mxu0 0.0
    %670 = vmatpush1.msra.mxu0 0.0
    %671 = vmatprep.subr.mxu0 0.0
    %672 = vmatpush1.msra.mxu0 0.0
    %673 = vmatprep.subr.mxu0 0.0
    %674 = vmatpush1.msra.mxu0 0.0
    %675 = vmatprep.subr.mxu0 0.0
    %676 = vmatpush1.msra.mxu0 0.0
    %677 = vmatprep.subr.mxu0 0.0
    %678 = vmatpush1.msra.mxu0 0.0
    %679 = vmatprep.subr.mxu0 0.0
    %680 = vmatpush1.msra.mxu0 0.0
    %681 = vmatprep.subr.mxu0 0.0
    %682 = vmatpush1.msra.mxu0 0.0
    %683 = vmatprep.mubr.f32.mxu0 0.0
    %v684 = vand.u32 %v32, 4294901760
    %685 = vmatmul.mubr.f32.gmra.mrb[0].mxu0 %v684
    %v686 = vpop.f32.mrb[0].mxu0
    %v687 = vadd.f32 %v600, %v686
    %v688 = vpop.f32.mrb[0].mxu0
    %689 = vdwg.mxu0
    %v690 = vmul.f32 %v687, 0.19634955
    %v691 = vand.u32 2147483647, %v690
    %vm692 = vcmp.le.f32.partialorder %v691, 0.7853982
    %vm693 = vcmp.lt.s32.totalorder %v690, 0
    %v694 = vand.u32 %v690, 2139095040
    %v695 = vshrl.u32 %v694, 23
    %v696 = vsub.s32 %v695, 127
    %v697 = vand.u32 2147483647, %v690
    %v698 = vand.u32 %v697, 8388607
    %v699 = vor.u32 %v698, 8388608
    %v700 = vsub.s32 0, %v699
    %v701 = vadd.s32 %v696, 1
    %vm702 = vcmp.gt.s32.totalorder %v701, 0
    %v703 = vsel %vm702, %v701, 0
    %v704 = vshrl.u32 %v703, 5
    %v705 = vand.u32 %v703, 31
    %v706 = vsub.s32 32, %v705
    %v707 = vshrl.u32 683565275, %v706
    %v708 = vshll.u32 683565275, %v705
    %v709 = vshrl.u32 2475754826, %v706
    %v710 = vor.u32 %v708, %v709
    %v711 = vshll.u32 2475754826, %v705
    %v712 = vshrl.u32 2131351028, %v706
    %v713 = vor.u32 %v711, %v712
    %v714 = vshll.u32 2131351028, %v705
    %v715 = vshrl.u32 2102212464, %v706
    %v716 = vor.u32 %v714, %v715
    %v717 = vshll.u32 2102212464, %v705
    %v718 = vshrl.u32 920167782, %v706
    %v719 = vor.u32 %v717, %v718
    %v720 = vshll.u32 920167782, %v705
    %v721 = vshrl.u32 1326507024, %v706
    %v722 = vor.u32 %v720, %v721
    %vm723 = vcmp.lt.s32.totalorder %v704, 1
    %vm724 = vcmp.lt.s32.totalorder %v704, 2
    %vm725 = vcmp.lt.s32.totalorder %v704, 3
    %vm726 = vcmp.lt.s32.totalorder %v704, 4
    %v727 = vsel %vm723, %v707, %v710
    %v728 = vsel %vm726, %v716, 2102212464
    %v729 = vsel %vm725, %v713, %v728
    %v730 = vsel %vm724, %v727, %v729
    %v731 = vsel %vm723, %v710, %v713
    %v732 = vsel %vm726, %v719, 920167782
    %v733 = vsel %vm725, %v716, %v732
    %v734 = vsel %vm724, %v731, %v733
    %v735 = vsel %vm723, %v713, %v716
    %v736 = vsel %vm726, %v722, 1326507024
    %v737 = vsel %vm725, %v719, %v736
    %v738 = vsel %vm724, %v735, %v737
    %v739 = vshll.u32 %v699, 8
    %v740 = vmul.u32.u64.compose %v739, %v738
    %v741 = vextract.low.u32 %v740
    %v742 = vextract.high.u32 %v740
    %v743 = vmul.u32.u64.compose %v739, %v734
    %v744 = vextract.low.u32 %v743
    %v745 = vextract.high.u32 %v743
    %v746 = vmul.u32 %v739, %v730
    %v747 = vadd.s32 %v742, %v744
    %vm748 = vc.u32 %v742, %v744
    %v749 = vadd.s32 %v745, 1
    %v750 = vsel %vm748, %v749, %v745
    %v751 = vadd.s32 %v746, %v750
    %v752 = vadd.s32 %v751, 536870912
    %v753 = vshrl.u32 %v752, 30
    %v754 = vshll.u32 %v753, 30
    %v755 = vsub.s32 %v751, %v754
    %vm756 = vcmp.lt.s32.totalorder %v755, 0
    %v757 = vsub.s32 0, %v755
    %v758 = vsel %vm756, %v757, %v755
    %v759 = vclz %v758
    %v760 = vsub.s32 %v759, 2
    %vm761 = vcmp.gt.s32.totalorder 0, %v760
    %v762 = vsel %vm761, 0, %v760
    %v763 = vsub.s32 32, %v762
    %v764 = vshll.u32 %v755, %v762
    %v765 = vshrl.u32 %v747, %v763
    %v766 = vor.u32 %v764, %v765
    %v767 = vsub.s32 4294967266, %v762
    %v768 = vadd.s32 %v767, 127
    %v769 = vshll.u32 %v768, 23
    %v770 = vor.u32 4788187, %v769
    %v771 = vand.u32 2147483647, %v770
    %v773 = vcvt.s32.f32 %v766
    %v774 = vmul.f32 %v773, %v771
    %v775 = vxor.u32 %v774, 2147483648
    %v776 = vsel %vm693, %v775, %v774
    %v777 = vsub.s32 4, %v753
    %v778 = vsel %vm693, %v777, %v753
    %v779 = vsel %vm692, %v690, %v776
    %v780 = vsel %vm692, 0, %v778
    %v781 = vcosq.f32.pop %v779
    %v782 = vsinq.f32.pop %v779
    %vm783 = vweird.f32 %v690
    %v784 = vadd.s32 %v780, 3
    %v785 = vand.u32 %v784, 3
    %vm786 = vcmp.lt.s32.totalorder %v785, 2
    %vm787 = vcmp.eq.s32.totalorder %v785, 0
    %v788 = vxor.u32 %v782, 2147483648
    %v789 = vsel %vm787, %v781, %v788
    %vm790 = vcmp.eq.s32.totalorder %v785, 2
    %v791 = vxor.u32 %v781, 2147483648
    %v792 = vsel %vm790, %v791, %v782
    %v793 = vsel %vm786, %v789, %v792
    %v794 = vsel %vm783, nan, %v793
    %v795 = vadd.f32 %v794, 0.0001
    %v796 = vrcp.pop %v795
    %v797 = vmul.f32 1.0, %v796
    %v798 = vsub.f32 %v797, 1.0
    %v799 = vld [vmem:[#allocation2] sm:$0x1]
    %v800 = vadd.f32 %v799, %v798
    %vm801 = vcmask 57344
    %802 = vst.msk [vmem:[#allocation2] sm:$0x1] %vm801, %v800
    // Predicated region
    $region14: #{tpu_custom_call.1} parent=1 // pred_check
      %p803 = pneg %p26
    $region15: #{tpu_custom_call.1} parent=1 // pred_check_branch
      %805 = sbr.rel (%p803) target = $region17
    $region16: #{tpu_custom_call.1} parent=1 // pred_region
      %v806 = vld [vmem:[#allocation2] sm:$0x1]
      %v807 = vsel %vm801, %v806, 0.0
      %808 = vadd.xlane.f32.xlu0 %v807
      %v809 = vpop.xlane.xlu0 %808
      %v810 = vrot.slane %v809, 4
      %v811 = vadd.f32 %v809, %v810
      %v812 = vrot.slane %v811, 2
      %v813 = vadd.f32 %v811, %v812
      %v814 = vrot.slane %v813, 1
      %v815 = vadd.f32 %v813, %v814
      %s816 = vtos %v815
      %v817 = vlaneseq
      %v818 = vshrl.u32 %v817, 7
      %v819 = vlaneseq
      %v820 = vand.u32 %v819, 127
      %vm821 = vcmp.eq.s32.totalorder %v818, 0
      %vm822 = vcmp.eq.s32.totalorder %v820, 0
      %vm823 = vmand %vm821, %vm822
      %v824 = vstv %s816
      %v825 = vsel %vm823, %v824, 0.0
      %826 = vst [vmem:[#allocation3] sm:$0xff] %v825
    $region17: #{tpu_custom_call.1} parent=1 // pred_fallthru
      _
    // Predicated region
    $region18: #{tpu_custom_call.1} parent=1 // pred_check
      _
    $region19: #{tpu_custom_call.1} parent=1 // pred_check_branch
      %828 = sbr.rel (0) target = $region21
    $region20: #{tpu_custom_call.1} parent=1 // pred_region
      %s830 = ssub.s32 128, 128
      %831 = vsyncadd [#allocation4], %s830
      %s833 = sshll.u32 [#allocation3], 4
      %s834 = int_to_ptr.vmem [resolvable:$true] %s833
      %836 = dma.vmem_to_hbm [thread:$0]  %s834, 128, %s2, [#allocation4]
    $region21: #{tpu_custom_call.1} parent=1 // pred_fallthru
      _
    // Predicated region
    $region22: #{tpu_custom_call.1} parent=1 // pred_check
      _
    $region23: #{tpu_custom_call.1} parent=1 // pred_check_branch
      %838 = sbr.rel (0) target = $region25
    $region24: #{tpu_custom_call.1} parent=1 // pred_region
      %839 = dma.done [#allocation4], 128
    $region25: #{tpu_custom_call.1} parent=1 // pred_fallthru
      _
    %840 = vsyncpa [#allocation4], 1

</llo_original>
